<compile_context>
chip_gen: v7x
topology: tpu7x:2x2x1
jax: 0.10.0
libtpu: 0.0.40
codegen_flags: <defaults>
</compile_context>

<pallas_src>
import jax
import jax.numpy as jnp
from jax import lax
from jax.experimental import pallas as pl
from jax.experimental.pallas import tpu as pltpu


def _lstm_slow_kernel(x_ref, wih_ref, whh_ref, b_ref, wlin_ref, blin_ref,
                      out_ref):
    # x_ref:    [B, T, D]   batch-major input (no wrapper transpose)
    # wih_ref:  [D, 4H]     transposed weight_ih  (gate order i,f,g,o)
    # whh_ref:  [H, 4H]     transposed weight_hh
    # b_ref:    [1, 4H]     b_ih + b_hh
    # wlin_ref: [H, H]      transposed linear weight
    # blin_ref: [1, H]      linear bias
    # out_ref:  [B, 2H]     packed [h_last | relu(linear(h_last))]
    B, T, D = x_ref.shape
    H = whh_ref.shape[0]

    # --- One-shot input projection for all timesteps, on the VPU. ---------
    # Contraction dim D=4 is too shallow for the MXU (and would be an f32
    # multi-pass there); D broadcast-FMAs keep the MXU free for W_hh.
    xw = x_ref[...]                                       # [B, T, D]  f32
    wih = wih_ref[...]                                    # [D, 4H]
    bias = b_ref[...]                                     # [1, 4H]
    z_all = jnp.broadcast_to(bias[:, None, :], (B, T, 4 * H))
    for k in range(D):
        z_all = z_all + xw[:, :, k:k + 1] * wih[k:k + 1, :][None]

    # --- Recurrence: bf16 single-pass MXU matmul, f32 accumulation. -------
    whh_bf16 = whh_ref[...].astype(jnp.bfloat16)          # resident [H, 4H]

    h = jnp.zeros((B, H), jnp.float32)
    c = jnp.zeros((B, H), jnp.float32)

    # Fully unrolled time loop (T static & tiny): the only in-loop MXU op is
    # the serially-dependent h @ W_hh.
    for t in range(T):
        if t == 0:
            z = z_all[:, 0, :]                            # h == 0 -> skip matmul
        else:
            z = z_all[:, t, :] + jnp.dot(
                h.astype(jnp.bfloat16), whh_bf16,
                preferred_element_type=jnp.float32)
        # Two full-vreg EUP ops instead of four sliced ones; gate math in f32.
        s = jax.nn.sigmoid(z)                             # [B, 4H]
        tt = jnp.tanh(z)                                  # [B, 4H]
        i_g = s[:, 0 * H:1 * H]
        f_g = s[:, 1 * H:2 * H]
        g_g = tt[:, 2 * H:3 * H]
        o_g = s[:, 3 * H:4 * H]
        c = f_g * c + i_g * g_g
        h = o_g * jnp.tanh(c)

    # feat[0] = h[:, -1, :]; feat[1] = relu(linear(h_last)).  Packed output.
    y = jnp.dot(h, wlin_ref[...], preferred_element_type=jnp.float32) \
        + blin_ref[...]
    out_ref[:, 0:H] = h
    out_ref[:, H:2 * H] = jnp.maximum(y, 0.0)


@jax.jit
def lstm_slow_forward(x, w_ih_t, w_hh_t, b, w_lin_t, b_lin):
    """x: [B, T, D] float32. Returns (h_last [B,H], relu(linear(h_last)) [B,H])."""
    B, T, D = x.shape
    H = w_hh_t.shape[0]

    vmem = pl.BlockSpec(memory_space=pltpu.MemorySpace.VMEM)
    packed = pl.pallas_call(
        _lstm_slow_kernel,
        out_shape=jax.ShapeDtypeStruct((B, 2 * H), jnp.float32),
        in_specs=[vmem] * 6,
        out_specs=vmem,
    )(x, w_ih_t, w_hh_t, b, w_lin_t, b_lin)
    return packed[:, :H], packed[:, H:]


def _reference(x, w_ih_t, w_hh_t, b, w_lin_t, b_lin,
               recur_dtype=jnp.float32):
    """Pure-JAX reference of the PyTorch forward (gate order i,f,g,o).

    recur_dtype=jnp.bfloat16 mirrors the kernel's bf16 recurrence numerics.
    """
    B, T, D = x.shape
    H = w_hh_t.shape[0]
    h = jnp.zeros((B, H), jnp.float32)
    c = jnp.zeros((B, H), jnp.float32)
    whh = w_hh_t.astype(recur_dtype)
    for t in range(T):
        z = jnp.dot(x[:, t, :], w_ih_t,
                    precision=lax.Precision.HIGHEST) + b
        z = z + jnp.dot(h.astype(recur_dtype), whh,
                        preferred_element_type=jnp.float32,
                        precision=lax.Precision.HIGHEST)
        i = jax.nn.sigmoid(z[:, 0 * H:1 * H])
        f = jax.nn.sigmoid(z[:, 1 * H:2 * H])
        g = jnp.tanh(z[:, 2 * H:3 * H])
        o = jax.nn.sigmoid(z[:, 3 * H:4 * H])
        c = f * c + i * g
        h = o * jnp.tanh(c)
    y = jnp.maximum(
        jnp.dot(h, w_lin_t, precision=lax.Precision.HIGHEST) + b_lin, 0.0)
    return h, y


if __name__ == "__main__":
    # args: input_dim=4, hidden_dim=32 ; x: [batch=2, seq=8, input_dim=4]
    B, T, D, H = 2, 8, 4, 32

    key = jax.random.PRNGKey(0)
    k = jax.random.split(key, 8)
    bound = 1.0 / jnp.sqrt(H)

    # Deterministic synthetic parameters (PyTorch-style uniform init).
    w_ih = jax.random.uniform(k[0], (4 * H, D), jnp.float32, -bound, bound)
    w_hh = jax.random.uniform(k[1], (4 * H, H), jnp.float32, -bound, bound)
    b_ih = jax.random.uniform(k[2], (4 * H,), jnp.float32, -bound, bound)
    b_hh = jax.random.uniform(k[3], (4 * H,), jnp.float32, -bound, bound)
    w_lin = jax.random.uniform(k[4], (H, H), jnp.float32, -bound, bound)
    b_lin = jax.random.uniform(k[5], (H,), jnp.float32, -bound, bound)

    x = jax.random.normal(k[6], (B, T, D), jnp.float32)

    # Pre-transpose / fold biases (glue in plain JAX, outside the hot path).
    w_ih_t = w_ih.T                                  # [D, 4H]
    w_hh_t = w_hh.T                                  # [H, 4H]
    b_comb = (b_ih + b_hh).reshape(1, 4 * H)         # [1, 4H]
    w_lin_t = w_lin.T                                # [H, H]
    b_lin_2d = b_lin.reshape(1, H)                   # [1, H]

    feat0, feat1 = lstm_slow_forward(x, w_ih_t, w_hh_t, b_comb,
                                     w_lin_t, b_lin_2d)
    jax.block_until_ready((feat0, feat1))

    # Bit-for-bit-style check against a reference that mirrors the kernel's
    # bf16 recurrence numerics (f32 accumulation).
    ref0, ref1 = _reference(x, w_ih_t, w_hh_t, b_comb, w_lin_t, b_lin_2d,
                            recur_dtype=jnp.bfloat16)
    assert jnp.allclose(feat0, ref0, atol=1e-3, rtol=1e-3), "h_last mismatch"
    assert jnp.allclose(feat1, ref1, atol=1e-3, rtol=1e-3), "linear/relu mismatch"

    # Sanity check vs the full-f32 PyTorch-equivalent forward: bf16 on the
    # recurrence only drifts by a few 1e-3 over T=8 at H=32.
    f0, f1 = _reference(x, w_ih_t, w_hh_t, b_comb, w_lin_t, b_lin_2d,
                        recur_dtype=jnp.float32)
    assert jnp.allclose(feat0, f0, atol=3e-2, rtol=3e-2), "f32-ref h_last drift"
    assert jnp.allclose(feat1, f1, atol=3e-2, rtol=3e-2), "f32-ref linear drift"

    print("KERNEL_OK")
</pallas_src>

<mosaic_0001>
module attributes {stable_mosaic.version = 11 : i64} {
  func.func @_lstm_slow_kernel(%arg0: memref<2x8x4xf32, #tpu.memory_space<vmem>>, %arg1: memref<4x128xf32, #tpu.memory_space<vmem>>, %arg2: memref<32x128xf32, #tpu.memory_space<vmem>>, %arg3: memref<1x128xf32, #tpu.memory_space<vmem>>, %arg4: memref<32x32xf32, #tpu.memory_space<vmem>>, %arg5: memref<1x32xf32, #tpu.memory_space<vmem>>, %arg6: memref<2x64xf32, #tpu.memory_space<vmem>>) attributes {dimension_semantics = [], scalar_prefetch = 0 : i64, scratch_operands = 0 : i64, tpu.core_type = #tpu.core_type<tc>} {
    %c0 = arith.constant 0 : index
    %c0_0 = arith.constant 0 : index
    %c0_1 = arith.constant 0 : index
    %0 = vector.load %arg0[%c0, %c0_0, %c0_1] : memref<2x8x4xf32, #tpu.memory_space<vmem>>, vector<2x8x4xf32>
    %c0_2 = arith.constant 0 : index
    %c0_3 = arith.constant 0 : index
    %1 = vector.load %arg1[%c0_2, %c0_3] : memref<4x128xf32, #tpu.memory_space<vmem>>, vector<4x128xf32>
    %c0_4 = arith.constant 0 : index
    %c0_5 = arith.constant 0 : index
    %2 = vector.load %arg3[%c0_4, %c0_5] : memref<1x128xf32, #tpu.memory_space<vmem>>, vector<1x128xf32>
    %3 = vector.shape_cast %2 : vector<1x128xf32> to vector<1x1x128xf32>
    %4 = vector.shape_cast %3 : vector<1x1x128xf32> to vector<1x1x128xf32>
    %5 = vector.broadcast %4 : vector<1x1x128xf32> to vector<2x8x128xf32>
    %6 = vector.extract_strided_slice %0 {offsets = [0, 0, 0], sizes = [2, 8, 1], strides = [1, 1, 1]} : vector<2x8x4xf32> to vector<2x8x1xf32>
    %7 = vector.extract_strided_slice %1 {offsets = [0, 0], sizes = [1, 128], strides = [1, 1]} : vector<4x128xf32> to vector<1x128xf32>
    %8 = vector.shape_cast %7 : vector<1x128xf32> to vector<1x1x128xf32>
    %9 = vector.broadcast %6 : vector<2x8x1xf32> to vector<2x8x128xf32>
    %10 = vector.broadcast %8 : vector<1x1x128xf32> to vector<2x8x128xf32>
    %11 = arith.mulf %9, %10 : vector<2x8x128xf32>
    %12 = arith.addf %5, %11 : vector<2x8x128xf32>
    %13 = vector.extract_strided_slice %0 {offsets = [0, 0, 1], sizes = [2, 8, 1], strides = [1, 1, 1]} : vector<2x8x4xf32> to vector<2x8x1xf32>
    %14 = vector.extract_strided_slice %1 {offsets = [1, 0], sizes = [1, 128], strides = [1, 1]} : vector<4x128xf32> to vector<1x128xf32>
    %15 = vector.shape_cast %14 : vector<1x128xf32> to vector<1x1x128xf32>
    %16 = vector.broadcast %13 : vector<2x8x1xf32> to vector<2x8x128xf32>
    %17 = vector.broadcast %15 : vector<1x1x128xf32> to vector<2x8x128xf32>
    %18 = arith.mulf %16, %17 : vector<2x8x128xf32>
    %19 = arith.addf %12, %18 : vector<2x8x128xf32>
    %20 = vector.extract_strided_slice %0 {offsets = [0, 0, 2], sizes = [2, 8, 1], strides = [1, 1, 1]} : vector<2x8x4xf32> to vector<2x8x1xf32>
    %21 = vector.extract_strided_slice %1 {offsets = [2, 0], sizes = [1, 128], strides = [1, 1]} : vector<4x128xf32> to vector<1x128xf32>
    %22 = vector.shape_cast %21 : vector<1x128xf32> to vector<1x1x128xf32>
    %23 = vector.broadcast %20 : vector<2x8x1xf32> to vector<2x8x128xf32>
    %24 = vector.broadcast %22 : vector<1x1x128xf32> to vector<2x8x128xf32>
    %25 = arith.mulf %23, %24 : vector<2x8x128xf32>
    %26 = arith.addf %19, %25 : vector<2x8x128xf32>
    %27 = vector.extract_strided_slice %0 {offsets = [0, 0, 3], sizes = [2, 8, 1], strides = [1, 1, 1]} : vector<2x8x4xf32> to vector<2x8x1xf32>
    %28 = vector.extract_strided_slice %1 {offsets = [3, 0], sizes = [1, 128], strides = [1, 1]} : vector<4x128xf32> to vector<1x128xf32>
    %29 = vector.shape_cast %28 : vector<1x128xf32> to vector<1x1x128xf32>
    %30 = vector.broadcast %27 : vector<2x8x1xf32> to vector<2x8x128xf32>
    %31 = vector.broadcast %29 : vector<1x1x128xf32> to vector<2x8x128xf32>
    %32 = arith.mulf %30, %31 : vector<2x8x128xf32>
    %33 = arith.addf %26, %32 : vector<2x8x128xf32>
    %c0_6 = arith.constant 0 : index
    %c0_7 = arith.constant 0 : index
    %34 = vector.load %arg2[%c0_6, %c0_7] : memref<32x128xf32, #tpu.memory_space<vmem>>, vector<32x128xf32>
    %35 = arith.truncf %34 : vector<32x128xf32> to vector<32x128xbf16>
    %cst = arith.constant 0.000000e+00 : f32
    %36 = vector.broadcast %cst : f32 to vector<2x32xf32>
    %37 = vector.extract_strided_slice %33 {offsets = [0, 0, 0], sizes = [2, 1, 128], strides = [1, 1, 1]} : vector<2x8x128xf32> to vector<2x1x128xf32>
    %38 = vector.shape_cast %37 : vector<2x1x128xf32> to vector<2x128xf32>
    %39 = arith.negf %38 : vector<2x128xf32>
    %40 = math.exp %39 : vector<2x128xf32>
    %cst_8 = arith.constant 1.000000e+00 : f32
    %41 = vector.broadcast %cst_8 : f32 to vector<2x128xf32>
    %42 = arith.addf %41, %40 : vector<2x128xf32>
    %43 = arith.divf %41, %42 : vector<2x128xf32>
    %44 = math.tanh %38 : vector<2x128xf32>
    %45 = vector.extract_strided_slice %43 {offsets = [0, 0], sizes = [2, 32], strides = [1, 1]} : vector<2x128xf32> to vector<2x32xf32>
    %46 = vector.extract_strided_slice %43 {offsets = [0, 32], sizes = [2, 32], strides = [1, 1]} : vector<2x128xf32> to vector<2x32xf32>
    %47 = vector.extract_strided_slice %44 {offsets = [0, 64], sizes = [2, 32], strides = [1, 1]} : vector<2x128xf32> to vector<2x32xf32>
    %48 = vector.extract_strided_slice %43 {offsets = [0, 96], sizes = [2, 32], strides = [1, 1]} : vector<2x128xf32> to vector<2x32xf32>
    %49 = arith.mulf %46, %36 : vector<2x32xf32>
    %50 = arith.mulf %45, %47 : vector<2x32xf32>
    %51 = arith.addf %49, %50 : vector<2x32xf32>
    %52 = math.tanh %51 : vector<2x32xf32>
    %53 = arith.mulf %48, %52 : vector<2x32xf32>
    %54 = vector.extract_strided_slice %33 {offsets = [0, 1, 0], sizes = [2, 1, 128], strides = [1, 1, 1]} : vector<2x8x128xf32> to vector<2x1x128xf32>
    %55 = vector.shape_cast %54 : vector<2x1x128xf32> to vector<2x128xf32>
    %56 = arith.truncf %53 : vector<2x32xf32> to vector<2x32xbf16>
    %cst_9 = arith.constant dense<0.000000e+00> : vector<2x128xf32>
    %57 = tpu.matmul %56, %35, %cst_9 {dimension_numbers = #tpu.dot_dimension_numbers<[1], [0], [0], [1], [0, 0, 1, 1], [], []>} : vector<2x32xbf16>, vector<32x128xbf16>, vector<2x128xf32> -> vector<2x128xf32>
    %58 = arith.addf %55, %57 : vector<2x128xf32>
    %59 = arith.negf %58 : vector<2x128xf32>
    %60 = math.exp %59 : vector<2x128xf32>
    %cst_10 = arith.constant 1.000000e+00 : f32
    %61 = vector.broadcast %cst_10 : f32 to vector<2x128xf32>
    %62 = arith.addf %61, %60 : vector<2x128xf32>
    %63 = arith.divf %61, %62 : vector<2x128xf32>
    %64 = math.tanh %58 : vector<2x128xf32>
    %65 = vector.extract_strided_slice %63 {offsets = [0, 0], sizes = [2, 32], strides = [1, 1]} : vector<2x128xf32> to vector<2x32xf32>
    %66 = vector.extract_strided_slice %63 {offsets = [0, 32], sizes = [2, 32], strides = [1, 1]} : vector<2x128xf32> to vector<2x32xf32>
    %67 = vector.extract_strided_slice %64 {offsets = [0, 64], sizes = [2, 32], strides = [1, 1]} : vector<2x128xf32> to vector<2x32xf32>
    %68 = vector.extract_strided_slice %63 {offsets = [0, 96], sizes = [2, 32], strides = [1, 1]} : vector<2x128xf32> to vector<2x32xf32>
    %69 = arith.mulf %66, %51 : vector<2x32xf32>
    %70 = arith.mulf %65, %67 : vector<2x32xf32>
    %71 = arith.addf %69, %70 : vector<2x32xf32>
    %72 = math.tanh %71 : vector<2x32xf32>
    %73 = arith.mulf %68, %72 : vector<2x32xf32>
    %74 = vector.extract_strided_slice %33 {offsets = [0, 2, 0], sizes = [2, 1, 128], strides = [1, 1, 1]} : vector<2x8x128xf32> to vector<2x1x128xf32>
    %75 = vector.shape_cast %74 : vector<2x1x128xf32> to vector<2x128xf32>
    %76 = arith.truncf %73 : vector<2x32xf32> to vector<2x32xbf16>
    %cst_11 = arith.constant dense<0.000000e+00> : vector<2x128xf32>
    %77 = tpu.matmul %76, %35, %cst_11 {dimension_numbers = #tpu.dot_dimension_numbers<[1], [0], [0], [1], [0, 0, 1, 1], [], []>} : vector<2x32xbf16>, vector<32x128xbf16>, vector<2x128xf32> -> vector<2x128xf32>
    %78 = arith.addf %75, %77 : vector<2x128xf32>
    %79 = arith.negf %78 : vector<2x128xf32>
    %80 = math.exp %79 : vector<2x128xf32>
    %cst_12 = arith.constant 1.000000e+00 : f32
    %81 = vector.broadcast %cst_12 : f32 to vector<2x128xf32>
    %82 = arith.addf %81, %80 : vector<2x128xf32>
    %83 = arith.divf %81, %82 : vector<2x128xf32>
    %84 = math.tanh %78 : vector<2x128xf32>
    %85 = vector.extract_strided_slice %83 {offsets = [0, 0], sizes = [2, 32], strides = [1, 1]} : vector<2x128xf32> to vector<2x32xf32>
    %86 = vector.extract_strided_slice %83 {offsets = [0, 32], sizes = [2, 32], strides = [1, 1]} : vector<2x128xf32> to vector<2x32xf32>
    %87 = vector.extract_strided_slice %84 {offsets = [0, 64], sizes = [2, 32], strides = [1, 1]} : vector<2x128xf32> to vector<2x32xf32>
    %88 = vector.extract_strided_slice %83 {offsets = [0, 96], sizes = [2, 32], strides = [1, 1]} : vector<2x128xf32> to vector<2x32xf32>
    %89 = arith.mulf %86, %71 : vector<2x32xf32>
    %90 = arith.mulf %85, %87 : vector<2x32xf32>
    %91 = arith.addf %89, %90 : vector<2x32xf32>
    %92 = math.tanh %91 : vector<2x32xf32>
    %93 = arith.mulf %88, %92 : vector<2x32xf32>
    %94 = vector.extract_strided_slice %33 {offsets = [0, 3, 0], sizes = [2, 1, 128], strides = [1, 1, 1]} : vector<2x8x128xf32> to vector<2x1x128xf32>
    %95 = vector.shape_cast %94 : vector<2x1x128xf32> to vector<2x128xf32>
    %96 = arith.truncf %93 : vector<2x32xf32> to vector<2x32xbf16>
    %cst_13 = arith.constant dense<0.000000e+00> : vector<2x128xf32>
    %97 = tpu.matmul %96, %35, %cst_13 {dimension_numbers = #tpu.dot_dimension_numbers<[1], [0], [0], [1], [0, 0, 1, 1], [], []>} : vector<2x32xbf16>, vector<32x128xbf16>, vector<2x128xf32> -> vector<2x128xf32>
    %98 = arith.addf %95, %97 : vector<2x128xf32>
    %99 = arith.negf %98 : vector<2x128xf32>
    %100 = math.exp %99 : vector<2x128xf32>
    %cst_14 = arith.constant 1.000000e+00 : f32
    %101 = vector.broadcast %cst_14 : f32 to vector<2x128xf32>
    %102 = arith.addf %101, %100 : vector<2x128xf32>
    %103 = arith.divf %101, %102 : vector<2x128xf32>
    %104 = math.tanh %98 : vector<2x128xf32>
    %105 = vector.extract_strided_slice %103 {offsets = [0, 0], sizes = [2, 32], strides = [1, 1]} : vector<2x128xf32> to vector<2x32xf32>
    %106 = vector.extract_strided_slice %103 {offsets = [0, 32], sizes = [2, 32], strides = [1, 1]} : vector<2x128xf32> to vector<2x32xf32>
    %107 = vector.extract_strided_slice %104 {offsets = [0, 64], sizes = [2, 32], strides = [1, 1]} : vector<2x128xf32> to vector<2x32xf32>
    %108 = vector.extract_strided_slice %103 {offsets = [0, 96], sizes = [2, 32], strides = [1, 1]} : vector<2x128xf32> to vector<2x32xf32>
    %109 = arith.mulf %106, %91 : vector<2x32xf32>
    %110 = arith.mulf %105, %107 : vector<2x32xf32>
    %111 = arith.addf %109, %110 : vector<2x32xf32>
    %112 = math.tanh %111 : vector<2x32xf32>
    %113 = arith.mulf %108, %112 : vector<2x32xf32>
    %114 = vector.extract_strided_slice %33 {offsets = [0, 4, 0], sizes = [2, 1, 128], strides = [1, 1, 1]} : vector<2x8x128xf32> to vector<2x1x128xf32>
    %115 = vector.shape_cast %114 : vector<2x1x128xf32> to vector<2x128xf32>
    %116 = arith.truncf %113 : vector<2x32xf32> to vector<2x32xbf16>
    %cst_15 = arith.constant dense<0.000000e+00> : vector<2x128xf32>
    %117 = tpu.matmul %116, %35, %cst_15 {dimension_numbers = #tpu.dot_dimension_numbers<[1], [0], [0], [1], [0, 0, 1, 1], [], []>} : vector<2x32xbf16>, vector<32x128xbf16>, vector<2x128xf32> -> vector<2x128xf32>
    %118 = arith.addf %115, %117 : vector<2x128xf32>
    %119 = arith.negf %118 : vector<2x128xf32>
    %120 = math.exp %119 : vector<2x128xf32>
    %cst_16 = arith.constant 1.000000e+00 : f32
    %121 = vector.broadcast %cst_16 : f32 to vector<2x128xf32>
    %122 = arith.addf %121, %120 : vector<2x128xf32>
    %123 = arith.divf %121, %122 : vector<2x128xf32>
    %124 = math.tanh %118 : vector<2x128xf32>
    %125 = vector.extract_strided_slice %123 {offsets = [0, 0], sizes = [2, 32], strides = [1, 1]} : vector<2x128xf32> to vector<2x32xf32>
    %126 = vector.extract_strided_slice %123 {offsets = [0, 32], sizes = [2, 32], strides = [1, 1]} : vector<2x128xf32> to vector<2x32xf32>
    %127 = vector.extract_strided_slice %124 {offsets = [0, 64], sizes = [2, 32], strides = [1, 1]} : vector<2x128xf32> to vector<2x32xf32>
    %128 = vector.extract_strided_slice %123 {offsets = [0, 96], sizes = [2, 32], strides = [1, 1]} : vector<2x128xf32> to vector<2x32xf32>
    %129 = arith.mulf %126, %111 : vector<2x32xf32>
    %130 = arith.mulf %125, %127 : vector<2x32xf32>
    %131 = arith.addf %129, %130 : vector<2x32xf32>
    %132 = math.tanh %131 : vector<2x32xf32>
    %133 = arith.mulf %128, %132 : vector<2x32xf32>
    %134 = vector.extract_strided_slice %33 {offsets = [0, 5, 0], sizes = [2, 1, 128], strides = [1, 1, 1]} : vector<2x8x128xf32> to vector<2x1x128xf32>
    %135 = vector.shape_cast %134 : vector<2x1x128xf32> to vector<2x128xf32>
    %136 = arith.truncf %133 : vector<2x32xf32> to vector<2x32xbf16>
    %cst_17 = arith.constant dense<0.000000e+00> : vector<2x128xf32>
    %137 = tpu.matmul %136, %35, %cst_17 {dimension_numbers = #tpu.dot_dimension_numbers<[1], [0], [0], [1], [0, 0, 1, 1], [], []>} : vector<2x32xbf16>, vector<32x128xbf16>, vector<2x128xf32> -> vector<2x128xf32>
    %138 = arith.addf %135, %137 : vector<2x128xf32>
    %139 = arith.negf %138 : vector<2x128xf32>
    %140 = math.exp %139 : vector<2x128xf32>
    %cst_18 = arith.constant 1.000000e+00 : f32
    %141 = vector.broadcast %cst_18 : f32 to vector<2x128xf32>
    %142 = arith.addf %141, %140 : vector<2x128xf32>
    %143 = arith.divf %141, %142 : vector<2x128xf32>
    %144 = math.tanh %138 : vector<2x128xf32>
    %145 = vector.extract_strided_slice %143 {offsets = [0, 0], sizes = [2, 32], strides = [1, 1]} : vector<2x128xf32> to vector<2x32xf32>
    %146 = vector.extract_strided_slice %143 {offsets = [0, 32], sizes = [2, 32], strides = [1, 1]} : vector<2x128xf32> to vector<2x32xf32>
    %147 = vector.extract_strided_slice %144 {offsets = [0, 64], sizes = [2, 32], strides = [1, 1]} : vector<2x128xf32> to vector<2x32xf32>
    %148 = vector.extract_strided_slice %143 {offsets = [0, 96], sizes = [2, 32], strides = [1, 1]} : vector<2x128xf32> to vector<2x32xf32>
    %149 = arith.mulf %146, %131 : vector<2x32xf32>
    %150 = arith.mulf %145, %147 : vector<2x32xf32>
    %151 = arith.addf %149, %150 : vector<2x32xf32>
    %152 = math.tanh %151 : vector<2x32xf32>
    %153 = arith.mulf %148, %152 : vector<2x32xf32>
    %154 = vector.extract_strided_slice %33 {offsets = [0, 6, 0], sizes = [2, 1, 128], strides = [1, 1, 1]} : vector<2x8x128xf32> to vector<2x1x128xf32>
    %155 = vector.shape_cast %154 : vector<2x1x128xf32> to vector<2x128xf32>
    %156 = arith.truncf %153 : vector<2x32xf32> to vector<2x32xbf16>
    %cst_19 = arith.constant dense<0.000000e+00> : vector<2x128xf32>
    %157 = tpu.matmul %156, %35, %cst_19 {dimension_numbers = #tpu.dot_dimension_numbers<[1], [0], [0], [1], [0, 0, 1, 1], [], []>} : vector<2x32xbf16>, vector<32x128xbf16>, vector<2x128xf32> -> vector<2x128xf32>
    %158 = arith.addf %155, %157 : vector<2x128xf32>
    %159 = arith.negf %158 : vector<2x128xf32>
    %160 = math.exp %159 : vector<2x128xf32>
    %cst_20 = arith.constant 1.000000e+00 : f32
    %161 = vector.broadcast %cst_20 : f32 to vector<2x128xf32>
    %162 = arith.addf %161, %160 : vector<2x128xf32>
    %163 = arith.divf %161, %162 : vector<2x128xf32>
    %164 = math.tanh %158 : vector<2x128xf32>
    %165 = vector.extract_strided_slice %163 {offsets = [0, 0], sizes = [2, 32], strides = [1, 1]} : vector<2x128xf32> to vector<2x32xf32>
    %166 = vector.extract_strided_slice %163 {offsets = [0, 32], sizes = [2, 32], strides = [1, 1]} : vector<2x128xf32> to vector<2x32xf32>
    %167 = vector.extract_strided_slice %164 {offsets = [0, 64], sizes = [2, 32], strides = [1, 1]} : vector<2x128xf32> to vector<2x32xf32>
    %168 = vector.extract_strided_slice %163 {offsets = [0, 96], sizes = [2, 32], strides = [1, 1]} : vector<2x128xf32> to vector<2x32xf32>
    %169 = arith.mulf %166, %151 : vector<2x32xf32>
    %170 = arith.mulf %165, %167 : vector<2x32xf32>
    %171 = arith.addf %169, %170 : vector<2x32xf32>
    %172 = math.tanh %171 : vector<2x32xf32>
    %173 = arith.mulf %168, %172 : vector<2x32xf32>
    %174 = vector.extract_strided_slice %33 {offsets = [0, 7, 0], sizes = [2, 1, 128], strides = [1, 1, 1]} : vector<2x8x128xf32> to vector<2x1x128xf32>
    %175 = vector.shape_cast %174 : vector<2x1x128xf32> to vector<2x128xf32>
    %176 = arith.truncf %173 : vector<2x32xf32> to vector<2x32xbf16>
    %cst_21 = arith.constant dense<0.000000e+00> : vector<2x128xf32>
    %177 = tpu.matmul %176, %35, %cst_21 {dimension_numbers = #tpu.dot_dimension_numbers<[1], [0], [0], [1], [0, 0, 1, 1], [], []>} : vector<2x32xbf16>, vector<32x128xbf16>, vector<2x128xf32> -> vector<2x128xf32>
    %178 = arith.addf %175, %177 : vector<2x128xf32>
    %179 = arith.negf %178 : vector<2x128xf32>
    %180 = math.exp %179 : vector<2x128xf32>
    %cst_22 = arith.constant 1.000000e+00 : f32
    %181 = vector.broadcast %cst_22 : f32 to vector<2x128xf32>
    %182 = arith.addf %181, %180 : vector<2x128xf32>
    %183 = arith.divf %181, %182 : vector<2x128xf32>
    %184 = math.tanh %178 : vector<2x128xf32>
    %185 = vector.extract_strided_slice %183 {offsets = [0, 0], sizes = [2, 32], strides = [1, 1]} : vector<2x128xf32> to vector<2x32xf32>
    %186 = vector.extract_strided_slice %183 {offsets = [0, 32], sizes = [2, 32], strides = [1, 1]} : vector<2x128xf32> to vector<2x32xf32>
    %187 = vector.extract_strided_slice %184 {offsets = [0, 64], sizes = [2, 32], strides = [1, 1]} : vector<2x128xf32> to vector<2x32xf32>
    %188 = vector.extract_strided_slice %183 {offsets = [0, 96], sizes = [2, 32], strides = [1, 1]} : vector<2x128xf32> to vector<2x32xf32>
    %189 = arith.mulf %186, %171 : vector<2x32xf32>
    %190 = arith.mulf %185, %187 : vector<2x32xf32>
    %191 = arith.addf %189, %190 : vector<2x32xf32>
    %192 = math.tanh %191 : vector<2x32xf32>
    %193 = arith.mulf %188, %192 : vector<2x32xf32>
    %c0_23 = arith.constant 0 : index
    %c0_24 = arith.constant 0 : index
    %194 = vector.load %arg4[%c0_23, %c0_24] : memref<32x32xf32, #tpu.memory_space<vmem>>, vector<32x32xf32>
    %cst_25 = arith.constant dense<0.000000e+00> : vector<2x32xf32>
    %195 = tpu.matmul %193, %194, %cst_25 {dimension_numbers = #tpu.dot_dimension_numbers<[1], [0], [0], [1], [0, 0, 1, 1], [], []>} : vector<2x32xf32>, vector<32x32xf32>, vector<2x32xf32> -> vector<2x32xf32>
    %c0_26 = arith.constant 0 : index
    %c0_27 = arith.constant 0 : index
    %196 = vector.load %arg5[%c0_26, %c0_27] : memref<1x32xf32, #tpu.memory_space<vmem>>, vector<1x32xf32>
    %197 = vector.broadcast %196 : vector<1x32xf32> to vector<2x32xf32>
    %198 = arith.addf %195, %197 : vector<2x32xf32>
    %c0_28 = arith.constant 0 : index
    %c0_29 = arith.constant 0 : index
    %199 = vector.load %arg6[%c0_28, %c0_29] : memref<2x64xf32, #tpu.memory_space<vmem>>, vector<2x32xf32>
    tpu.vector_store %arg6[%c0_28, %c0_29], %193 {strides = array<i32>} : memref<2x64xf32, #tpu.memory_space<vmem>>, vector<2x32xf32>,
    %cst_30 = arith.constant 0.000000e+00 : f32
    %200 = vector.broadcast %cst_30 : f32 to vector<2x32xf32>
    %201 = arith.maximumf %198, %200 : vector<2x32xf32>
    %c0_31 = arith.constant 0 : index
    %c32 = arith.constant 32 : index
    %202 = vector.load %arg6[%c0_31, %c32] : memref<2x64xf32, #tpu.memory_space<vmem>>, vector<2x32xf32>
    tpu.vector_store %arg6[%c0_31, %c32], %201 {strides = array<i32>} : memref<2x64xf32, #tpu.memory_space<vmem>>, vector<2x32xf32>,
    return
  }
}

</mosaic_0001>

<llo_original>
// kernel: lstm_slow_forward.1
$region0: #{lstm_slow_forward.1}
  #allocation0 [shape = 'u32[]', space=smem, size = 0x4, offset = 0x4, fixed_abs, tag = 'smem constant byte address 0x4 - core index']
  #allocation1 [shape = 'u32[144,128]{1,0:T(1,128)}', space=vmem, size = 0x12000, scoped, tag = 'internal scratch']
  %s0 = inlined_call_operand.vmem [shape: f32[2,8,4], index: 0, kind: input, shape index: {}]
  %s1 = inlined_call_operand.vmem [shape: f32[4,128], index: 1, kind: input, shape index: {}]
  %s2 = inlined_call_operand.hbm [shape: f32[32,128], index: 2, kind: input, shape index: {}]
  %s3 = inlined_call_operand.vmem [shape: f32[1,128], index: 3, kind: input, shape index: {}]
  %s4 = inlined_call_operand.vmem [shape: f32[32,32], index: 4, kind: input, shape index: {}]
  %s5 = inlined_call_operand.vmem [shape: f32[1,32], index: 5, kind: input, shape index: {}]
  %s6 = inlined_call_operand.vmem [shape: f32[2,64], index: 6, kind: output, shape index: {}]
  %s7 = sld [smem:[#allocation0]]
  $region38: #{lstm_slow_forward.1} parent=0
    _
  %s9 = ssub.s32 1, %s7
  %s10 = scalar_select 0, %s9, %s7
  $region1: #{lstm_slow_forward.1} parent=0
    #allocation2 [shape = 'u8[16384]{0}', space=vmem, size = 0x4000, scoped, tag = 'input window, operand 2, single buffered']
    #allocation3 [shape = 's32[1]{0}', space=sflag, size = 0x4, scoped, tag = 'scoped memory for lstm_slow_forward.1']
    %11 = vsyncpa [#allocation3], 0
    // Predicated region
    $region2: #{lstm_slow_forward.1} parent=1 // pred_check
      _
    $region3: #{lstm_slow_forward.1} parent=1 // pred_check_branch
      %13 = sbr.rel (0) target = $region5
    $region4: #{lstm_slow_forward.1} parent=1 // pred_region
      _
    $region5: #{lstm_slow_forward.1} parent=1 // pred_fallthru
      _
    // Predicated region
    $region6: #{lstm_slow_forward.1} parent=1 // pred_check
      _
    $region7: #{lstm_slow_forward.1} parent=1 // pred_check_branch
      %15 = sbr.rel (0) target = $region9
    $region8: #{lstm_slow_forward.1} parent=1 // pred_region
      _
    $region9: #{lstm_slow_forward.1} parent=1 // pred_fallthru
      _
    // Predicated region
    $region10: #{lstm_slow_forward.1} parent=1 // pred_check
      _
    $region11: #{lstm_slow_forward.1} parent=1 // pred_check_branch
      %17 = sbr.rel (0) target = $region13
    $region12: #{lstm_slow_forward.1} parent=1 // pred_region
      %s19 = ssub.s32 512, 512
      %20 = vsyncadd [#allocation3], %s19
      %s21 = sshll.u32 [#allocation2], 4
      %s22 = int_to_ptr.vmem [resolvable:$true] %s21
      %27 = dma.hbm_to_vmem [thread:$0]  %s2, 512, %s22, [#allocation3], 128, 128, 8
    $region13: #{lstm_slow_forward.1} parent=1 // pred_fallthru
      _
    // Predicated region
    $region14: #{lstm_slow_forward.1} parent=1 // pred_check
      _
    $region15: #{lstm_slow_forward.1} parent=1 // pred_check_branch
      %29 = sbr.rel (0) target = $region17
    $region16: #{lstm_slow_forward.1} parent=1 // pred_region
      _
    $region17: #{lstm_slow_forward.1} parent=1 // pred_fallthru
      _
    // Predicated region
    $region18: #{lstm_slow_forward.1} parent=1 // pred_check
      _
    $region19: #{lstm_slow_forward.1} parent=1 // pred_check_branch
      %31 = sbr.rel (0) target = $region21
    $region20: #{lstm_slow_forward.1} parent=1 // pred_region
      _
    $region21: #{lstm_slow_forward.1} parent=1 // pred_fallthru
      _
    // Predicated region
    $region22: #{lstm_slow_forward.1} parent=1 // pred_check
      _
    $region23: #{lstm_slow_forward.1} parent=1 // pred_check_branch
      %33 = sbr.rel (0) target = $region25
    $region24: #{lstm_slow_forward.1} parent=1 // pred_region
      _
    $region25: #{lstm_slow_forward.1} parent=1 // pred_fallthru
      _
    // Predicated region
    $region26: #{lstm_slow_forward.1} parent=1 // pred_check
      _
    $region27: #{lstm_slow_forward.1} parent=1 // pred_check_branch
      %35 = sbr.rel (0) target = $region29
    $region28: #{lstm_slow_forward.1} parent=1 // pred_region
      %36 = dma.done [#allocation3], 512
    $region29: #{lstm_slow_forward.1} parent=1 // pred_fallthru
      _
    %v38 = vld [vmem:[%s0] sm:$0xff]
    %v39 = vld [vmem:[%s0 + $0x8] sm:$0xff]
    %v40 = vld [vmem:[%s1] sm:$0xf]
    %v41 = vld [vmem:[%s3] sm:$0x1]
    %v43 = vlaneseq
    %v44 = vshrl.u32 %v43, 7
    %v45 = vsub.s32 0, %v44
    %v46 = vrot.slane %v41, %v45
    %49 = vset.pattern.permute.xlu0 0
    %50 = vperm.xlu0 %49, %v38
    %v51 = vpop.permute.xlu0 %50
    %54 = vset.pattern.permute.xlu0 0
    %55 = vperm.xlu0 %54, %v39
    %v56 = vpop.permute.xlu0 %55
    %v58 = vlaneseq
    %v59 = vshrl.u32 %v58, 7
    %v60 = vsub.s32 0, %v59
    %v61 = vrot.slane %v40, %v60
    %v62 = vmul.f32 %v51, %v61
    %v63 = vmul.f32 %v56, %v61
    %v64 = vadd.f32 %v46, %v62
    %v65 = vadd.f32 %v46, %v63
    %66 = vset.pattern.permute.xlu0 1
    %67 = vperm.xlu0 %66, %v38
    %v68 = vpop.permute.xlu0 %67
    %70 = vset.pattern.permute.xlu0 1
    %71 = vperm.xlu0 %70, %v39
    %v72 = vpop.permute.xlu0 %71
    %v74 = vlaneseq
    %v75 = vshrl.u32 %v74, 7
    %v76 = vsub.s32 1, %v75
    %v77 = vrot.slane %v40, %v76
    %v78 = vmul.f32 %v68, %v77
    %v79 = vmul.f32 %v72, %v77
    %v80 = vadd.f32 %v64, %v78
    %v81 = vadd.f32 %v65, %v79
    %82 = vset.pattern.permute.xlu0 2
    %83 = vperm.xlu0 %82, %v38
    %v84 = vpop.permute.xlu0 %83
    %86 = vset.pattern.permute.xlu0 2
    %87 = vperm.xlu0 %86, %v39
    %v88 = vpop.permute.xlu0 %87
    %v90 = vlaneseq
    %v91 = vshrl.u32 %v90, 7
    %v92 = vsub.s32 2, %v91
    %v93 = vrot.slane %v40, %v92
    %v94 = vmul.f32 %v84, %v93
    %v95 = vmul.f32 %v88, %v93
    %v96 = vadd.f32 %v80, %v94
    %v97 = vadd.f32 %v81, %v95
    %98 = vset.pattern.permute.xlu0 3
    %99 = vperm.xlu0 %98, %v38
    %v100 = vpop.permute.xlu0 %99
    %102 = vset.pattern.permute.xlu0 3
    %103 = vperm.xlu0 %102, %v39
    %v104 = vpop.permute.xlu0 %103
    %v106 = vlaneseq
    %v107 = vshrl.u32 %v106, 7
    %v108 = vsub.s32 3, %v107
    %v109 = vrot.slane %v40, %v108
    %v110 = vmul.f32 %v100, %v109
    %v111 = vmul.f32 %v104, %v109
    %v112 = vadd.f32 %v96, %v110
    %v113 = vadd.f32 %v97, %v111
    %v114 = vld [vmem:[#allocation2] sm:$0xff]
    %v115 = vld [vmem:[#allocation2 + $0x8] sm:$0xff]
    %v116 = vld [vmem:[#allocation2 + $0x10] sm:$0xff]
    %v117 = vld [vmem:[#allocation2 + $0x18] sm:$0xff]
    %v118 = vpack.c.bf16 %v115, %v114
    %v119 = vpack.c.bf16 %v117, %v116
    %v120 = vxor.u32 %v112, 2147483648
    %v121 = vxor.u32 %v113, 2147483648
    %v122 = vmul.f32 %v120, 1.442695
    %v123 = vpow.pop %v122
    %v124 = vmul.f32 %v121, 1.442695
    %v125 = vpow.pop %v124
    %v126 = vadd.f32 %v123, 1.0
    %v127 = vadd.f32 %v125, 1.0
    %v128 = vrcp.pop %v126
    %v129 = vmul.f32 1.0, %v128
    %v130 = vrcp.pop %v127
    %v131 = vmul.f32 1.0, %v130
    %v132 = vtanh.pop %v112
    %v133 = vtanh.pop %v113
    %v134 = vmul.f32 %v129, 0.0
    %v135 = vmul.f32 %v131, 0.0
    %138 = vrot.lane.b32.xlu0 %v132, 64
    %v139 = vpop.permute.xlu0 %138
    %140 = vrot.lane.b32.xlu0 %v133, 64
    %v141 = vpop.permute.xlu0 %140
    %v144 = vmul.f32 %v129, %v139
    %v145 = vmul.f32 %v131, %v141
    %148 = vrot.lane.b32.xlu0 %v144, 32
    %v149 = vpop.permute.xlu0 %148
    %150 = vrot.lane.b32.xlu0 %v145, 32
    %v151 = vpop.permute.xlu0 %150
    %v154 = vadd.f32 %v134, %v149
    %v155 = vadd.f32 %v135, %v151
    %v156 = vtanh.pop %v154
    %v157 = vtanh.pop %v155
    %160 = vrot.lane.b32.xlu0 %v156, 64
    %v161 = vpop.permute.xlu0 %160
    %162 = vrot.lane.b32.xlu0 %v157, 64
    %v163 = vpop.permute.xlu0 %162
    %v166 = vmul.f32 %v129, %v161
    %v167 = vmul.f32 %v131, %v163
    %v168 = vpack.c.bf16 %v166, %v166
    %v169 = vpack.c.bf16 %v167, %v167
    %v172 = vunpack.c.l.b16 %v168
    %v173 = vunpack.c.l.b16 %v169
    %v174 = vrot.slane %v173, 7
    %vm175 = vcmask 1041409
    %v176 = vsel %vm175, %v174, %v172
    %v177 = vpack.c.b16 %v176, %v176
    %178 = vrot.lane.b32.xlu0 %v177, 32
    %v179 = vpop.permute.xlu0 %178
    %vm180 = vcmask 261120
    %v182 = vsel %vm180, %v179, 0
    %184 = vmatprep.subr.bf16.mxu0 0
    %185 = vmatpush1.bf16.msra.mxu0 %v118
    %186 = vmatprep.subr.bf16.mxu0 0
    %187 = vmatpush1.bf16.msra.mxu0 %v119
    %188 = vmatprep.subr.bf16.mxu0 0
    %189 = vmatpush1.bf16.msra.mxu0 0
    %190 = vmatprep.subr.bf16.mxu0 0
    %191 = vmatpush1.bf16.msra.mxu0 0
    %192 = vmatprep.subr.bf16.mxu0 0
    %193 = vmatpush1.bf16.msra.mxu0 0
    %194 = vmatprep.subr.bf16.mxu0 0
    %195 = vmatpush1.bf16.msra.mxu0 0
    %196 = vmatprep.subr.bf16.mxu0 0
    %197 = vmatpush1.bf16.msra.mxu0 0
    %198 = vmatprep.subr.bf16.mxu0 0
    %199 = vmatpush1.bf16.msra.mxu0 0
    %200 = vmatprep.subr.bf16.mxu0 0
    %201 = vmatpush1.bf16.msra.mxu0 0
    %202 = vmatprep.subr.bf16.mxu0 0
    %203 = vmatpush1.bf16.msra.mxu0 0
    %204 = vmatprep.subr.bf16.mxu0 0
    %205 = vmatpush1.bf16.msra.mxu0 0
    %206 = vmatprep.subr.bf16.mxu0 0
    %207 = vmatpush1.bf16.msra.mxu0 0
    %208 = vmatprep.subr.bf16.mxu0 0
    %209 = vmatpush1.bf16.msra.mxu0 0
    %210 = vmatprep.subr.bf16.mxu0 0
    %211 = vmatpush1.bf16.msra.mxu0 0
    %212 = vmatprep.subr.bf16.mxu0 0
    %213 = vmatpush1.bf16.msra.mxu0 0
    %214 = vmatprep.subr.bf16.mxu0 0
    %215 = vmatpush1.bf16.msra.mxu0 0
    %216 = vmatprep.mubr.bf16.mxu0 0
    %217 = vmatmul.mubr.bf16.gmra.mrb[0].mxu0 %v182
    %v218 = vpop.f32.mrb[0].mxu0
    %v219 = vadd.f32 0.0, %v218
    %v220 = vpop.f32.mrb[0].mxu0
    %v221 = vpop.f32.mrb[0].mxu0
    %v222 = vpop.f32.mrb[0].mxu0
    %223 = vdwg.mxu0
    %v225 = vrot.slane %v219, 7
    %v228 = vadd.f32 %v112, %v225
    %v229 = vadd.f32 %v113, %v219
    %v230 = vxor.u32 %v228, 2147483648
    %v231 = vxor.u32 %v229, 2147483648
    %v232 = vmul.f32 %v230, 1.442695
    %v233 = vpow.pop %v232
    %v234 = vmul.f32 %v231, 1.442695
    %v235 = vpow.pop %v234
    %v236 = vadd.f32 %v233, 1.0
    %v237 = vadd.f32 %v235, 1.0
    %v238 = vrcp.pop %v236
    %v239 = vmul.f32 1.0, %v238
    %v240 = vrcp.pop %v237
    %v241 = vmul.f32 1.0, %v240
    %v242 = vtanh.pop %v228
    %v243 = vtanh.pop %v229
    %v246 = vrot.slane %v154, 7
    %v247 = vrot.slane %v155, 7
    %v250 = vmul.f32 %v239, %v246
    %v251 = vmul.f32 %v241, %v247
    %254 = vrot.lane.b32.xlu0 %v242, 64
    %v255 = vpop.permute.xlu0 %254
    %256 = vrot.lane.b32.xlu0 %v243, 64
    %v257 = vpop.permute.xlu0 %256
    %v260 = vmul.f32 %v239, %v255
    %v261 = vmul.f32 %v241, %v257
    %264 = vrot.lane.b32.xlu0 %v260, 32
    %v265 = vpop.permute.xlu0 %264
    %266 = vrot.lane.b32.xlu0 %v261, 32
    %v267 = vpop.permute.xlu0 %266
    %v270 = vadd.f32 %v250, %v265
    %v271 = vadd.f32 %v251, %v267
    %v272 = vtanh.pop %v270
    %v273 = vtanh.pop %v271
    %276 = vrot.lane.b32.xlu0 %v272, 64
    %v277 = vpop.permute.xlu0 %276
    %278 = vrot.lane.b32.xlu0 %v273, 64
    %v279 = vpop.permute.xlu0 %278
    %v282 = vmul.f32 %v239, %v277
    %v283 = vmul.f32 %v241, %v279
    %v284 = vpack.c.bf16 %v282, %v282
    %v285 = vpack.c.bf16 %v283, %v283
    %v288 = vunpack.c.l.b16 %v284
    %v289 = vunpack.c.l.b16 %v285
    %v290 = vrot.slane %v288, 1
    %v291 = vsel %vm175, %v289, %v290
    %v292 = vpack.c.b16 %v291, %v291
    %293 = vrot.lane.b32.xlu0 %v292, 32
    %v294 = vpop.permute.xlu0 %293
    %v296 = vsel %vm180, %v294, 0
    %298 = vmatprep.subr.bf16.mxu0 0
    %299 = vmatpush1.bf16.msra.mxu0 %v118
    %300 = vmatprep.subr.bf16.mxu0 0
    %301 = vmatpush1.bf16.msra.mxu0 %v119
    %302 = vmatprep.subr.bf16.mxu0 0
    %303 = vmatpush1.bf16.msra.mxu0 0
    %304 = vmatprep.subr.bf16.mxu0 0
    %305 = vmatpush1.bf16.msra.mxu0 0
    %306 = vmatprep.subr.bf16.mxu0 0
    %307 = vmatpush1.bf16.msra.mxu0 0
    %308 = vmatprep.subr.bf16.mxu0 0
    %309 = vmatpush1.bf16.msra.mxu0 0
    %310 = vmatprep.subr.bf16.mxu0 0
    %311 = vmatpush1.bf16.msra.mxu0 0
    %312 = vmatprep.subr.bf16.mxu0 0
    %313 = vmatpush1.bf16.msra.mxu0 0
    %314 = vmatprep.subr.bf16.mxu0 0
    %315 = vmatpush1.bf16.msra.mxu0 0
    %316 = vmatprep.subr.bf16.mxu0 0
    %317 = vmatpush1.bf16.msra.mxu0 0
    %318 = vmatprep.subr.bf16.mxu0 0
    %319 = vmatpush1.bf16.msra.mxu0 0
    %320 = vmatprep.subr.bf16.mxu0 0
    %321 = vmatpush1.bf16.msra.mxu0 0
    %322 = vmatprep.subr.bf16.mxu0 0
    %323 = vmatpush1.bf16.msra.mxu0 0
    %324 = vmatprep.subr.bf16.mxu0 0
    %325 = vmatpush1.bf16.msra.mxu0 0
    %326 = vmatprep.subr.bf16.mxu0 0
    %327 = vmatpush1.bf16.msra.mxu0 0
    %328 = vmatprep.subr.bf16.mxu0 0
    %329 = vmatpush1.bf16.msra.mxu0 0
    %330 = vmatprep.mubr.bf16.mxu0 0
    %331 = vmatmul.mubr.bf16.gmra.mrb[0].mxu0 %v296
    %v332 = vpop.f32.mrb[0].mxu0
    %v333 = vadd.f32 0.0, %v332
    %v334 = vpop.f32.mrb[0].mxu0
    %v335 = vpop.f32.mrb[0].mxu0
    %v336 = vpop.f32.mrb[0].mxu0
    %337 = vdwg.mxu0
    %v339 = vrot.slane %v333, 6
    %v340 = vrot.slane %v333, 7
    %v343 = vadd.f32 %v112, %v339
    %v344 = vadd.f32 %v113, %v340
    %v345 = vxor.u32 %v343, 2147483648
    %v346 = vxor.u32 %v344, 2147483648
    %v347 = vmul.f32 %v345, 1.442695
    %v348 = vpow.pop %v347
    %v349 = vmul.f32 %v346, 1.442695
    %v350 = vpow.pop %v349
    %v351 = vadd.f32 %v348, 1.0
    %v352 = vadd.f32 %v350, 1.0
    %v353 = vrcp.pop %v351
    %v354 = vmul.f32 1.0, %v353
    %v355 = vrcp.pop %v352
    %v356 = vmul.f32 1.0, %v355
    %v357 = vtanh.pop %v343
    %v358 = vtanh.pop %v344
    %v361 = vrot.slane %v270, 7
    %v362 = vrot.slane %v271, 7
    %v365 = vmul.f32 %v354, %v361
    %v366 = vmul.f32 %v356, %v362
    %369 = vrot.lane.b32.xlu0 %v357, 64
    %v370 = vpop.permute.xlu0 %369
    %371 = vrot.lane.b32.xlu0 %v358, 64
    %v372 = vpop.permute.xlu0 %371
    %v375 = vmul.f32 %v354, %v370
    %v376 = vmul.f32 %v356, %v372
    %379 = vrot.lane.b32.xlu0 %v375, 32
    %v380 = vpop.permute.xlu0 %379
    %381 = vrot.lane.b32.xlu0 %v376, 32
    %v382 = vpop.permute.xlu0 %381
    %v385 = vadd.f32 %v365, %v380
    %v386 = vadd.f32 %v366, %v382
    %v387 = vtanh.pop %v385
    %v388 = vtanh.pop %v386
    %391 = vrot.lane.b32.xlu0 %v387, 64
    %v392 = vpop.permute.xlu0 %391
    %393 = vrot.lane.b32.xlu0 %v388, 64
    %v394 = vpop.permute.xlu0 %393
    %v397 = vmul.f32 %v354, %v392
    %v398 = vmul.f32 %v356, %v394
    %v399 = vpack.c.bf16 %v397, %v397
    %v400 = vpack.c.bf16 %v398, %v398
    %v403 = vunpack.c.l.b16 %v399
    %v404 = vunpack.c.l.b16 %v400
    %v405 = vrot.slane %v403, 2
    %v406 = vrot.slane %v404, 1
    %v407 = vsel %vm175, %v406, %v405
    %v408 = vpack.c.b16 %v407, %v407
    %409 = vrot.lane.b32.xlu0 %v408, 32
    %v410 = vpop.permute.xlu0 %409
    %v412 = vsel %vm180, %v410, 0
    %414 = vmatprep.subr.bf16.mxu0 0
    %415 = vmatpush1.bf16.msra.mxu0 %v118
    %416 = vmatprep.subr.bf16.mxu0 0
    %417 = vmatpush1.bf16.msra.mxu0 %v119
    %418 = vmatprep.subr.bf16.mxu0 0
    %419 = vmatpush1.bf16.msra.mxu0 0
    %420 = vmatprep.subr.bf16.mxu0 0
    %421 = vmatpush1.bf16.msra.mxu0 0
    %422 = vmatprep.subr.bf16.mxu0 0
    %423 = vmatpush1.bf16.msra.mxu0 0
    %424 = vmatprep.subr.bf16.mxu0 0
    %425 = vmatpush1.bf16.msra.mxu0 0
    %426 = vmatprep.subr.bf16.mxu0 0
    %427 = vmatpush1.bf16.msra.mxu0 0
    %428 = vmatprep.subr.bf16.mxu0 0
    %429 = vmatpush1.bf16.msra.mxu0 0
    %430 = vmatprep.subr.bf16.mxu0 0
    %431 = vmatpush1.bf16.msra.mxu0 0
    %432 = vmatprep.subr.bf16.mxu0 0
    %433 = vmatpush1.bf16.msra.mxu0 0
    %434 = vmatprep.subr.bf16.mxu0 0
    %435 = vmatpush1.bf16.msra.mxu0 0
    %436 = vmatprep.subr.bf16.mxu0 0
    %437 = vmatpush1.bf16.msra.mxu0 0
    %438 = vmatprep.subr.bf16.mxu0 0
    %439 = vmatpush1.bf16.msra.mxu0 0
    %440 = vmatprep.subr.bf16.mxu0 0
    %441 = vmatpush1.bf16.msra.mxu0 0
    %442 = vmatprep.subr.bf16.mxu0 0
    %443 = vmatpush1.bf16.msra.mxu0 0
    %444 = vmatprep.subr.bf16.mxu0 0
    %445 = vmatpush1.bf16.msra.mxu0 0
    %446 = vmatprep.mubr.bf16.mxu0 0
    %447 = vmatmul.mubr.bf16.gmra.mrb[0].mxu0 %v412
    %v448 = vpop.f32.mrb[0].mxu0
    %v449 = vadd.f32 0.0, %v448
    %v450 = vpop.f32.mrb[0].mxu0
    %v451 = vpop.f32.mrb[0].mxu0
    %v452 = vpop.f32.mrb[0].mxu0
    %453 = vdwg.mxu0
    %v455 = vrot.slane %v449, 5
    %v456 = vrot.slane %v449, 6
    %v459 = vadd.f32 %v112, %v455
    %v460 = vadd.f32 %v113, %v456
    %v461 = vxor.u32 %v459, 2147483648
    %v462 = vxor.u32 %v460, 2147483648
    %v463 = vmul.f32 %v461, 1.442695
    %v464 = vpow.pop %v463
    %v465 = vmul.f32 %v462, 1.442695
    %v466 = vpow.pop %v465
    %v467 = vadd.f32 %v464, 1.0
    %v468 = vadd.f32 %v466, 1.0
    %v469 = vrcp.pop %v467
    %v470 = vmul.f32 1.0, %v469
    %v471 = vrcp.pop %v468
    %v472 = vmul.f32 1.0, %v471
    %v473 = vtanh.pop %v459
    %v474 = vtanh.pop %v460
    %v477 = vrot.slane %v385, 7
    %v478 = vrot.slane %v386, 7
    %v481 = vmul.f32 %v470, %v477
    %v482 = vmul.f32 %v472, %v478
    %485 = vrot.lane.b32.xlu0 %v473, 64
    %v486 = vpop.permute.xlu0 %485
    %487 = vrot.lane.b32.xlu0 %v474, 64
    %v488 = vpop.permute.xlu0 %487
    %v491 = vmul.f32 %v470, %v486
    %v492 = vmul.f32 %v472, %v488
    %495 = vrot.lane.b32.xlu0 %v491, 32
    %v496 = vpop.permute.xlu0 %495
    %497 = vrot.lane.b32.xlu0 %v492, 32
    %v498 = vpop.permute.xlu0 %497
    %v501 = vadd.f32 %v481, %v496
    %v502 = vadd.f32 %v482, %v498
    %v503 = vtanh.pop %v501
    %v504 = vtanh.pop %v502
    %507 = vrot.lane.b32.xlu0 %v503, 64
    %v508 = vpop.permute.xlu0 %507
    %509 = vrot.lane.b32.xlu0 %v504, 64
    %v510 = vpop.permute.xlu0 %509
    %v513 = vmul.f32 %v470, %v508
    %v514 = vmul.f32 %v472, %v510
    %v515 = vpack.c.bf16 %v513, %v513
    %v516 = vpack.c.bf16 %v514, %v514
    %v519 = vunpack.c.l.b16 %v515
    %v520 = vunpack.c.l.b16 %v516
    %v521 = vrot.slane %v519, 3
    %v522 = vrot.slane %v520, 2
    %v523 = vsel %vm175, %v522, %v521
    %v524 = vpack.c.b16 %v523, %v523
    %525 = vrot.lane.b32.xlu0 %v524, 32
    %v526 = vpop.permute.xlu0 %525
    %v528 = vsel %vm180, %v526, 0
    %530 = vmatprep.subr.bf16.mxu0 0
    %531 = vmatpush1.bf16.msra.mxu0 %v118
    %532 = vmatprep.subr.bf16.mxu0 0
    %533 = vmatpush1.bf16.msra.mxu0 %v119
    %534 = vmatprep.subr.bf16.mxu0 0
    %535 = vmatpush1.bf16.msra.mxu0 0
    %536 = vmatprep.subr.bf16.mxu0 0
    %537 = vmatpush1.bf16.msra.mxu0 0
    %538 = vmatprep.subr.bf16.mxu0 0
    %539 = vmatpush1.bf16.msra.mxu0 0
    %540 = vmatprep.subr.bf16.mxu0 0
    %541 = vmatpush1.bf16.msra.mxu0 0
    %542 = vmatprep.subr.bf16.mxu0 0
    %543 = vmatpush1.bf16.msra.mxu0 0
    %544 = vmatprep.subr.bf16.mxu0 0
    %545 = vmatpush1.bf16.msra.mxu0 0
    %546 = vmatprep.subr.bf16.mxu0 0
    %547 = vmatpush1.bf16.msra.mxu0 0
    %548 = vmatprep.subr.bf16.mxu0 0
    %549 = vmatpush1.bf16.msra.mxu0 0
    %550 = vmatprep.subr.bf16.mxu0 0
    %551 = vmatpush1.bf16.msra.mxu0 0
    %552 = vmatprep.subr.bf16.mxu0 0
    %553 = vmatpush1.bf16.msra.mxu0 0
    %554 = vmatprep.subr.bf16.mxu0 0
    %555 = vmatpush1.bf16.msra.mxu0 0
    %556 = vmatprep.subr.bf16.mxu0 0
    %557 = vmatpush1.bf16.msra.mxu0 0
    %558 = vmatprep.subr.bf16.mxu0 0
    %559 = vmatpush1.bf16.msra.mxu0 0
    %560 = vmatprep.subr.bf16.mxu0 0
    %561 = vmatpush1.bf16.msra.mxu0 0
    %562 = vmatprep.mubr.bf16.mxu0 0
    %563 = vmatmul.mubr.bf16.gmra.mrb[0].mxu0 %v528
    %v564 = vpop.f32.mrb[0].mxu0
    %v565 = vadd.f32 0.0, %v564
    %v566 = vpop.f32.mrb[0].mxu0
    %v567 = vpop.f32.mrb[0].mxu0
    %v568 = vpop.f32.mrb[0].mxu0
    %569 = vdwg.mxu0
    %v571 = vrot.slane %v565, 4
    %v572 = vrot.slane %v565, 5
    %v575 = vadd.f32 %v112, %v571
    %v576 = vadd.f32 %v113, %v572
    %v577 = vxor.u32 %v575, 2147483648
    %v578 = vxor.u32 %v576, 2147483648
    %v579 = vmul.f32 %v577, 1.442695
    %v580 = vpow.pop %v579
    %v581 = vmul.f32 %v578, 1.442695
    %v582 = vpow.pop %v581
    %v583 = vadd.f32 %v580, 1.0
    %v584 = vadd.f32 %v582, 1.0
    %v585 = vrcp.pop %v583
    %v586 = vmul.f32 1.0, %v585
    %v587 = vrcp.pop %v584
    %v588 = vmul.f32 1.0, %v587
    %v589 = vtanh.pop %v575
    %v590 = vtanh.pop %v576
    %v593 = vrot.slane %v501, 7
    %v594 = vrot.slane %v502, 7
    %v597 = vmul.f32 %v586, %v593
    %v598 = vmul.f32 %v588, %v594
    %601 = vrot.lane.b32.xlu0 %v589, 64
    %v602 = vpop.permute.xlu0 %601
    %603 = vrot.lane.b32.xlu0 %v590, 64
    %v604 = vpop.permute.xlu0 %603
    %v607 = vmul.f32 %v586, %v602
    %v608 = vmul.f32 %v588, %v604
    %611 = vrot.lane.b32.xlu0 %v607, 32
    %v612 = vpop.permute.xlu0 %611
    %613 = vrot.lane.b32.xlu0 %v608, 32
    %v614 = vpop.permute.xlu0 %613
    %v617 = vadd.f32 %v597, %v612
    %v618 = vadd.f32 %v598, %v614
    %v619 = vtanh.pop %v617
    %v620 = vtanh.pop %v618
    %623 = vrot.lane.b32.xlu0 %v619, 64
    %v624 = vpop.permute.xlu0 %623
    %625 = vrot.lane.b32.xlu0 %v620, 64
    %v626 = vpop.permute.xlu0 %625
    %v629 = vmul.f32 %v586, %v624
    %v630 = vmul.f32 %v588, %v626
    %v631 = vpack.c.bf16 %v629, %v629
    %v632 = vpack.c.bf16 %v630, %v630
    %v635 = vunpack.c.l.b16 %v631
    %v636 = vunpack.c.l.b16 %v632
    %v637 = vrot.slane %v635, 4
    %v638 = vrot.slane %v636, 3
    %v639 = vsel %vm175, %v638, %v637
    %v640 = vpack.c.b16 %v639, %v639
    %641 = vrot.lane.b32.xlu0 %v640, 32
    %v642 = vpop.permute.xlu0 %641
    %v644 = vsel %vm180, %v642, 0
    %646 = vmatprep.subr.bf16.mxu0 0
    %647 = vmatpush1.bf16.msra.mxu0 %v118
    %648 = vmatprep.subr.bf16.mxu0 0
    %649 = vmatpush1.bf16.msra.mxu0 %v119
    %650 = vmatprep.subr.bf16.mxu0 0
    %651 = vmatpush1.bf16.msra.mxu0 0
    %652 = vmatprep.subr.bf16.mxu0 0
    %653 = vmatpush1.bf16.msra.mxu0 0
    %654 = vmatprep.subr.bf16.mxu0 0
    %655 = vmatpush1.bf16.msra.mxu0 0
    %656 = vmatprep.subr.bf16.mxu0 0
    %657 = vmatpush1.bf16.msra.mxu0 0
    %658 = vmatprep.subr.bf16.mxu0 0
    %659 = vmatpush1.bf16.msra.mxu0 0
    %660 = vmatprep.subr.bf16.mxu0 0
    %661 = vmatpush1.bf16.msra.mxu0 0
    %662 = vmatprep.subr.bf16.mxu0 0
    %663 = vmatpush1.bf16.msra.mxu0 0
    %664 = vmatprep.subr.bf16.mxu0 0
    %665 = vmatpush1.bf16.msra.mxu0 0
    %666 = vmatprep.subr.bf16.mxu0 0
    %667 = vmatpush1.bf16.msra.mxu0 0
    %668 = vmatprep.subr.bf16.mxu0 0
    %669 = vmatpush1.bf16.msra.mxu0 0
    %670 = vmatprep.subr.bf16.mxu0 0
    %671 = vmatpush1.bf16.msra.mxu0 0
    %672 = vmatprep.subr.bf16.mxu0 0
    %673 = vmatpush1.bf16.msra.mxu0 0
    %674 = vmatprep.subr.bf16.mxu0 0
    %675 = vmatpush1.bf16.msra.mxu0 0
    %676 = vmatprep.subr.bf16.mxu0 0
    %677 = vmatpush1.bf16.msra.mxu0 0
    %678 = vmatprep.mubr.bf16.mxu0 0
    %679 = vmatmul.mubr.bf16.gmra.mrb[0].mxu0 %v644
    %v680 = vpop.f32.mrb[0].mxu0
    %v681 = vadd.f32 0.0, %v680
    %v682 = vpop.f32.mrb[0].mxu0
    %v683 = vpop.f32.mrb[0].mxu0
    %v684 = vpop.f32.mrb[0].mxu0
    %685 = vdwg.mxu0
    %v687 = vrot.slane %v681, 3
    %v688 = vrot.slane %v681, 4
    %v691 = vadd.f32 %v112, %v687
    %v692 = vadd.f32 %v113, %v688
    %v693 = vxor.u32 %v691, 2147483648
    %v694 = vxor.u32 %v692, 2147483648
    %v695 = vmul.f32 %v693, 1.442695
    %v696 = vpow.pop %v695
    %v697 = vmul.f32 %v694, 1.442695
    %v698 = vpow.pop %v697
    %v699 = vadd.f32 %v696, 1.0
    %v700 = vadd.f32 %v698, 1.0
    %v701 = vrcp.pop %v699
    %v702 = vmul.f32 1.0, %v701
    %v703 = vrcp.pop %v700
    %v704 = vmul.f32 1.0, %v703
    %v705 = vtanh.pop %v691
    %v706 = vtanh.pop %v692
    %v709 = vrot.slane %v617, 7
    %v710 = vrot.slane %v618, 7
    %v713 = vmul.f32 %v702, %v709
    %v714 = vmul.f32 %v704, %v710
    %717 = vrot.lane.b32.xlu0 %v705, 64
    %v718 = vpop.permute.xlu0 %717
    %719 = vrot.lane.b32.xlu0 %v706, 64
    %v720 = vpop.permute.xlu0 %719
    %v723 = vmul.f32 %v702, %v718
    %v724 = vmul.f32 %v704, %v720
    %727 = vrot.lane.b32.xlu0 %v723, 32
    %v728 = vpop.permute.xlu0 %727
    %729 = vrot.lane.b32.xlu0 %v724, 32
    %v730 = vpop.permute.xlu0 %729
    %v733 = vadd.f32 %v713, %v728
    %v734 = vadd.f32 %v714, %v730
    %v735 = vtanh.pop %v733
    %v736 = vtanh.pop %v734
    %739 = vrot.lane.b32.xlu0 %v735, 64
    %v740 = vpop.permute.xlu0 %739
    %741 = vrot.lane.b32.xlu0 %v736, 64
    %v742 = vpop.permute.xlu0 %741
    %v745 = vmul.f32 %v702, %v740
    %v746 = vmul.f32 %v704, %v742
    %v747 = vpack.c.bf16 %v745, %v745
    %v748 = vpack.c.bf16 %v746, %v746
    %v751 = vunpack.c.l.b16 %v747
    %v752 = vunpack.c.l.b16 %v748
    %v753 = vrot.slane %v751, 5
    %v754 = vrot.slane %v752, 4
    %v755 = vsel %vm175, %v754, %v753
    %v756 = vpack.c.b16 %v755, %v755
    %757 = vrot.lane.b32.xlu0 %v756, 32
    %v758 = vpop.permute.xlu0 %757
    %v760 = vsel %vm180, %v758, 0
    %762 = vmatprep.subr.bf16.mxu0 0
    %763 = vmatpush1.bf16.msra.mxu0 %v118
    %764 = vmatprep.subr.bf16.mxu0 0
    %765 = vmatpush1.bf16.msra.mxu0 %v119
    %766 = vmatprep.subr.bf16.mxu0 0
    %767 = vmatpush1.bf16.msra.mxu0 0
    %768 = vmatprep.subr.bf16.mxu0 0
    %769 = vmatpush1.bf16.msra.mxu0 0
    %770 = vmatprep.subr.bf16.mxu0 0
    %771 = vmatpush1.bf16.msra.mxu0 0
    %772 = vmatprep.subr.bf16.mxu0 0
    %773 = vmatpush1.bf16.msra.mxu0 0
    %774 = vmatprep.subr.bf16.mxu0 0
    %775 = vmatpush1.bf16.msra.mxu0 0
    %776 = vmatprep.subr.bf16.mxu0 0
    %777 = vmatpush1.bf16.msra.mxu0 0
    %778 = vmatprep.subr.bf16.mxu0 0
    %779 = vmatpush1.bf16.msra.mxu0 0
    %780 = vmatprep.subr.bf16.mxu0 0
    %781 = vmatpush1.bf16.msra.mxu0 0
    %782 = vmatprep.subr.bf16.mxu0 0
    %783 = vmatpush1.bf16.msra.mxu0 0
    %784 = vmatprep.subr.bf16.mxu0 0
    %785 = vmatpush1.bf16.msra.mxu0 0
    %786 = vmatprep.subr.bf16.mxu0 0
    %787 = vmatpush1.bf16.msra.mxu0 0
    %788 = vmatprep.subr.bf16.mxu0 0
    %789 = vmatpush1.bf16.msra.mxu0 0
    %790 = vmatprep.subr.bf16.mxu0 0
    %791 = vmatpush1.bf16.msra.mxu0 0
    %792 = vmatprep.subr.bf16.mxu0 0
    %793 = vmatpush1.bf16.msra.mxu0 0
    %794 = vmatprep.mubr.bf16.mxu0 0
    %795 = vmatmul.mubr.bf16.gmra.mrb[0].mxu0 %v760
    %v796 = vpop.f32.mrb[0].mxu0
    %v797 = vadd.f32 0.0, %v796
    %v798 = vpop.f32.mrb[0].mxu0
    %v799 = vpop.f32.mrb[0].mxu0
    %v800 = vpop.f32.mrb[0].mxu0
    %801 = vdwg.mxu0
    %v803 = vrot.slane %v797, 2
    %v804 = vrot.slane %v797, 3
    %v807 = vadd.f32 %v112, %v803
    %v808 = vadd.f32 %v113, %v804
    %v809 = vxor.u32 %v807, 2147483648
    %v810 = vxor.u32 %v808, 2147483648
    %v811 = vmul.f32 %v809, 1.442695
    %v812 = vpow.pop %v811
    %v813 = vmul.f32 %v810, 1.442695
    %v814 = vpow.pop %v813
    %v815 = vadd.f32 %v812, 1.0
    %v816 = vadd.f32 %v814, 1.0
    %v817 = vrcp.pop %v815
    %v818 = vmul.f32 1.0, %v817
    %v819 = vrcp.pop %v816
    %v820 = vmul.f32 1.0, %v819
    %v821 = vtanh.pop %v807
    %v822 = vtanh.pop %v808
    %v825 = vrot.slane %v733, 7
    %v826 = vrot.slane %v734, 7
    %v829 = vmul.f32 %v818, %v825
    %v830 = vmul.f32 %v820, %v826
    %833 = vrot.lane.b32.xlu0 %v821, 64
    %v834 = vpop.permute.xlu0 %833
    %835 = vrot.lane.b32.xlu0 %v822, 64
    %v836 = vpop.permute.xlu0 %835
    %v839 = vmul.f32 %v818, %v834
    %v840 = vmul.f32 %v820, %v836
    %843 = vrot.lane.b32.xlu0 %v839, 32
    %v844 = vpop.permute.xlu0 %843
    %845 = vrot.lane.b32.xlu0 %v840, 32
    %v846 = vpop.permute.xlu0 %845
    %v849 = vadd.f32 %v829, %v844
    %v850 = vadd.f32 %v830, %v846
    %v851 = vtanh.pop %v849
    %v852 = vtanh.pop %v850
    %855 = vrot.lane.b32.xlu0 %v851, 64
    %v856 = vpop.permute.xlu0 %855
    %857 = vrot.lane.b32.xlu0 %v852, 64
    %v858 = vpop.permute.xlu0 %857
    %v861 = vmul.f32 %v818, %v856
    %v862 = vmul.f32 %v820, %v858
    %v863 = vpack.c.bf16 %v861, %v861
    %v864 = vpack.c.bf16 %v862, %v862
    %v867 = vunpack.c.l.b16 %v863
    %v868 = vunpack.c.l.b16 %v864
    %v869 = vrot.slane %v867, 6
    %v870 = vrot.slane %v868, 5
    %v871 = vsel %vm175, %v870, %v869
    %v872 = vpack.c.b16 %v871, %v871
    %873 = vrot.lane.b32.xlu0 %v872, 32
    %v874 = vpop.permute.xlu0 %873
    %v876 = vsel %vm180, %v874, 0
    %878 = vmatprep.subr.bf16.mxu0 0
    %879 = vmatpush1.bf16.msra.mxu0 %v118
    %880 = vmatprep.subr.bf16.mxu0 0
    %881 = vmatpush1.bf16.msra.mxu0 %v119
    %882 = vmatprep.subr.bf16.mxu0 0
    %883 = vmatpush1.bf16.msra.mxu0 0
    %884 = vmatprep.subr.bf16.mxu0 0
    %885 = vmatpush1.bf16.msra.mxu0 0
    %886 = vmatprep.subr.bf16.mxu0 0
    %887 = vmatpush1.bf16.msra.mxu0 0
    %888 = vmatprep.subr.bf16.mxu0 0
    %889 = vmatpush1.bf16.msra.mxu0 0
    %890 = vmatprep.subr.bf16.mxu0 0
    %891 = vmatpush1.bf16.msra.mxu0 0
    %892 = vmatprep.subr.bf16.mxu0 0
    %893 = vmatpush1.bf16.msra.mxu0 0
    %894 = vmatprep.subr.bf16.mxu0 0
    %895 = vmatpush1.bf16.msra.mxu0 0
    %896 = vmatprep.subr.bf16.mxu0 0
    %897 = vmatpush1.bf16.msra.mxu0 0
    %898 = vmatprep.subr.bf16.mxu0 0
    %899 = vmatpush1.bf16.msra.mxu0 0
    %900 = vmatprep.subr.bf16.mxu0 0
    %901 = vmatpush1.bf16.msra.mxu0 0
    %902 = vmatprep.subr.bf16.mxu0 0
    %903 = vmatpush1.bf16.msra.mxu0 0
    %904 = vmatprep.subr.bf16.mxu0 0
    %905 = vmatpush1.bf16.msra.mxu0 0
    %906 = vmatprep.subr.bf16.mxu0 0
    %907 = vmatpush1.bf16.msra.mxu0 0
    %908 = vmatprep.subr.bf16.mxu0 0
    %909 = vmatpush1.bf16.msra.mxu0 0
    %910 = vmatprep.mubr.bf16.mxu0 0
    %911 = vmatmul.mubr.bf16.gmra.mrb[0].mxu0 %v876
    %v912 = vpop.f32.mrb[0].mxu0
    %v913 = vadd.f32 0.0, %v912
    %v914 = vpop.f32.mrb[0].mxu0
    %v915 = vpop.f32.mrb[0].mxu0
    %v916 = vpop.f32.mrb[0].mxu0
    %917 = vdwg.mxu0
    %v919 = vrot.slane %v913, 1
    %v920 = vrot.slane %v913, 2
    %v923 = vadd.f32 %v112, %v919
    %v924 = vadd.f32 %v113, %v920
    %v925 = vxor.u32 %v923, 2147483648
    %v926 = vxor.u32 %v924, 2147483648
    %v927 = vmul.f32 %v925, 1.442695
    %v928 = vpow.pop %v927
    %v929 = vmul.f32 %v926, 1.442695
    %v930 = vpow.pop %v929
    %v931 = vadd.f32 %v928, 1.0
    %v932 = vadd.f32 %v930, 1.0
    %v933 = vrcp.pop %v931
    %v934 = vmul.f32 1.0, %v933
    %v935 = vrcp.pop %v932
    %v936 = vmul.f32 1.0, %v935
    %v937 = vtanh.pop %v923
    %v938 = vtanh.pop %v924
    %v941 = vrot.slane %v849, 7
    %v942 = vrot.slane %v850, 7
    %v945 = vmul.f32 %v934, %v941
    %v946 = vmul.f32 %v936, %v942
    %949 = vrot.lane.b32.xlu0 %v937, 64
    %v950 = vpop.permute.xlu0 %949
    %951 = vrot.lane.b32.xlu0 %v938, 64
    %v952 = vpop.permute.xlu0 %951
    %v955 = vmul.f32 %v934, %v950
    %v956 = vmul.f32 %v936, %v952
    %959 = vrot.lane.b32.xlu0 %v955, 32
    %v960 = vpop.permute.xlu0 %959
    %961 = vrot.lane.b32.xlu0 %v956, 32
    %v962 = vpop.permute.xlu0 %961
    %v965 = vadd.f32 %v945, %v960
    %v966 = vadd.f32 %v946, %v962
    %v967 = vtanh.pop %v965
    %v968 = vtanh.pop %v966
    %971 = vrot.lane.b32.xlu0 %v967, 64
    %v972 = vpop.permute.xlu0 %971
    %973 = vrot.lane.b32.xlu0 %v968, 64
    %v974 = vpop.permute.xlu0 %973
    %v977 = vmul.f32 %v934, %v972
    %v978 = vmul.f32 %v936, %v974
    %v979 = vld [vmem:[%s4] sm:$0xff]
    %v980 = vld [vmem:[%s4 + $0x8] sm:$0xff]
    %v981 = vld [vmem:[%s4 + $0x10] sm:$0xff]
    %v982 = vld [vmem:[%s4 + $0x18] sm:$0xff]
    %v983 = vld [vmem:[%s5] sm:$0x1]
    %v985 = vlaneseq
    %v986 = vshrl.u32 %v985, 7
    %v987 = vsub.s32 0, %v986
    %v988 = vrot.slane %v983, %v987
    %v992 = vrot.slane %v977, 7
    %v993 = vrot.slane %v978, 6
    %v994 = vsel %vm175, %v993, %v992
    %995 = vrot.lane.b32.xlu0 %v994, 32
    %v996 = vpop.permute.xlu0 %995
    %v997 = vsel %vm180, %v996, 0
    %999 = vmatprep.subr.mxu0 0.0
    %1000 = vmatpush1.msra.mxu0 %v979
    %1001 = vmatprep.subr.mxu0 0.0
    %1002 = vmatpush1.msra.mxu0 %v980
    %1003 = vmatprep.subr.mxu0 0.0
    %1004 = vmatpush1.msra.mxu0 %v981
    %1005 = vmatprep.subr.mxu0 0.0
    %1006 = vmatpush1.msra.mxu0 %v982
    %1007 = vmatprep.subr.mxu0 0.0
    %1008 = vmatpush1.msra.mxu0 0.0
    %1009 = vmatprep.subr.mxu0 0.0
    %1010 = vmatpush1.msra.mxu0 0.0
    %1011 = vmatprep.subr.mxu0 0.0
    %1012 = vmatpush1.msra.mxu0 0.0
    %1013 = vmatprep.subr.mxu0 0.0
    %1014 = vmatpush1.msra.mxu0 0.0
    %1015 = vmatprep.subr.mxu0 0.0
    %1016 = vmatpush1.msra.mxu0 0.0
    %1017 = vmatprep.subr.mxu0 0.0
    %1018 = vmatpush1.msra.mxu0 0.0
    %1019 = vmatprep.subr.mxu0 0.0
    %1020 = vmatpush1.msra.mxu0 0.0
    %1021 = vmatprep.subr.mxu0 0.0
    %1022 = vmatpush1.msra.mxu0 0.0
    %1023 = vmatprep.subr.mxu0 0.0
    %1024 = vmatpush1.msra.mxu0 0.0
    %1025 = vmatprep.subr.mxu0 0.0
    %1026 = vmatpush1.msra.mxu0 0.0
    %1027 = vmatprep.subr.mxu0 0.0
    %1028 = vmatpush1.msra.mxu0 0.0
    %1029 = vmatprep.subr.mxu0 0.0
    %1030 = vmatpush1.msra.mxu0 0.0
    %1031 = vmatprep.subr.mxu0 0.0
    %1032 = vmatpush1.msra.mxu0 0.0
    %1033 = vmatprep.subr.mxu0 0.0
    %1034 = vmatpush1.msra.mxu0 0.0
    %1035 = vmatprep.subr.mxu0 0.0
    %1036 = vmatpush1.msra.mxu0 0.0
    %1037 = vmatprep.subr.mxu0 0.0
    %1038 = vmatpush1.msra.mxu0 0.0
    %1039 = vmatprep.subr.mxu0 0.0
    %1040 = vmatpush1.msra.mxu0 0.0
    %1041 = vmatprep.subr.mxu0 0.0
    %1042 = vmatpush1.msra.mxu0 0.0
    %1043 = vmatprep.subr.mxu0 0.0
    %1044 = vmatpush1.msra.mxu0 0.0
    %1045 = vmatprep.subr.mxu0 0.0
    %1046 = vmatpush1.msra.mxu0 0.0
    %1047 = vmatprep.subr.mxu0 0.0
    %1048 = vmatpush1.msra.mxu0 0.0
    %1049 = vmatprep.subr.mxu0 0.0
    %1050 = vmatpush1.msra.mxu0 0.0
    %1051 = vmatprep.subr.mxu0 0.0
    %1052 = vmatpush1.msra.mxu0 0.0
    %1053 = vmatprep.subr.mxu0 0.0
    %1054 = vmatpush1.msra.mxu0 0.0
    %1055 = vmatprep.subr.mxu0 0.0
    %1056 = vmatpush1.msra.mxu0 0.0
    %1057 = vmatprep.subr.mxu0 0.0
    %1058 = vmatpush1.msra.mxu0 0.0
    %1059 = vmatprep.subr.mxu0 0.0
    %1060 = vmatpush1.msra.mxu0 0.0
    %1061 = vmatprep.subr.mxu0 0.0
    %1062 = vmatpush1.msra.mxu0 0.0
    %1063 = vmatprep.mubr.f32.mxu0 0.0
    %1064 = vmatmul.mubr.f32.gmra.mrb[0].mxu0 %v997
    %v1065 = vpop.f32.mrb[0].mxu0
    %v1066 = vadd.f32 %v988, %v1065
    %v1067 = vpop.f32.mrb[0].mxu0
    %1068 = vdwg.mxu0
    %v1069 = vrot.slane %v978, 7
    %1070 = vrot.lane.b32.xlu0 %v977, 32
    %v1071 = vpop.permute.xlu0 %1070
    %1072 = vrot.lane.b32.xlu0 %v1069, 32
    %v1073 = vpop.permute.xlu0 %1072
    %vm1076 = vcmask 261127
    %1077 = vst.msk [vmem:[%s6 - $0x7] sm:$0x80] %vm1076, %v1071
    %vm1078 = vcmask 253952
    %1079 = vst.msk [vmem:[%s6 + $0x1] sm:$0x1] %vm1078, %v1073
    %v1080 = vmax.f32 %v1066, 0.0
    %1082 = vrot.lane.b32.xlu0 %v1080, 32
    %v1083 = vpop.permute.xlu0 %1082
    %vm1085 = vcmask 517376
    %1086 = vst.msk [vmem:[%s6] sm:$0x3] %vm1085, %v1083
    // Predicated region
    $region30: #{lstm_slow_forward.1} parent=1 // pred_check
      _
    $region31: #{lstm_slow_forward.1} parent=1 // pred_check_branch
      %1088 = sbr.rel (0) target = $region33
    $region32: #{lstm_slow_forward.1} parent=1 // pred_region
      _
    $region33: #{lstm_slow_forward.1} parent=1 // pred_fallthru
      _
    // Predicated region
    $region34: #{lstm_slow_forward.1} parent=1 // pred_check
      _
    $region35: #{lstm_slow_forward.1} parent=1 // pred_check_branch
      %1090 = sbr.rel (0) target = $region37
    $region36: #{lstm_slow_forward.1} parent=1 // pred_region
      _
    $region37: #{lstm_slow_forward.1} parent=1 // pred_fallthru
      _
    %1091 = vsyncpa [#allocation3], 1

</llo_original>
